<compile_context>
chip_gen: v6e
topology: v6e:2x2x1
jax: 0.10.0
libtpu: 0.0.40
codegen_flags: <defaults>
</compile_context>

<pallas_src>
import jax
import jax.numpy as jnp
from jax.experimental import pallas as pl
from jax.experimental.pallas import tpu as pltpu

HIDDEN = 256
LANE = 128
NEG_SLOPE = 0.01


def _round_up(a, m):
    return (a + m - 1) // m * m


def _leaky_relu(v):
    return jnp.where(v > 0, v, NEG_SLOPE * v)


def mlp_kernel(x_ref,
               w1_ref, b1_ref,
               w2_ref, b2_ref,
               w3_ref, b3_ref,
               w4_ref, b4_ref,
               w5_ref, b5_ref,
               o_ref):
    """One batch tile per grid step; all weights resident in VMEM."""

    def layer(h, w_ref, b_ref, act):
        # bf16 MXU inputs, f32 accumulation, f32 elementwise epilogue.
        acc = jnp.dot(h.astype(jnp.bfloat16), w_ref[...],
                      preferred_element_type=jnp.float32)
        acc = acc + b_ref[...]
        return _leaky_relu(acc) if act else acc

    h = x_ref[...].astype(jnp.float32)
    h = layer(h, w1_ref, b1_ref, True)
    h = layer(h, w2_ref, b2_ref, True)
    h = layer(h, w3_ref, b3_ref, True)
    h = layer(h, w4_ref, b4_ref, True)
    out = layer(h, w5_ref, b5_ref, False)
    o_ref[...] = out.astype(o_ref.dtype)


def mlp_forward(x, params, *, tm=None):
    """params: list of (W, b), W shape (in, out) [transposed vs torch], b (1, out)."""
    batch, in_dim = x.shape
    out_dim = params[-1][0].shape[1]
    out_pad = _round_up(out_dim, LANE)

    # Batch tile: up to 256 rows per grid step (fills MXU rows, stays well
    # under the 32 MiB scoped / 64 MiB physical VMEM budget on v7x).
    if tm is None:
        tm = min(256, _round_up(batch, 8))
    batch_p = _round_up(batch, tm)
    x_p = jnp.pad(x, ((0, batch_p - batch), (0, 0))) if batch_p != batch else x

    # Prepare weights: bf16 storage; last layer padded to a lane-dense width.
    prepped = []
    n_layers = len(params)
    for i, (w, b) in enumerate(params):
        if i == n_layers - 1 and out_pad != out_dim:
            w = jnp.pad(w, ((0, 0), (0, out_pad - out_dim)))
            b = jnp.pad(b, ((0, 0), (0, out_pad - out_dim)))
        prepped.append((w.astype(jnp.bfloat16), b.astype(jnp.float32)))

    flat_args = [x_p]
    for w, b in prepped:
        flat_args.extend([w, b])

    # BlockSpecs: x / out tiled over batch; weights+biases resident (block
    # index constant across the grid).
    in_specs = [pl.BlockSpec((tm, in_dim), lambda i: (i, 0))]
    for w, b in prepped:
        in_specs.append(pl.BlockSpec(w.shape, lambda i: (0, 0)))
        in_specs.append(pl.BlockSpec(b.shape, lambda i: (0, 0)))
    out_specs = pl.BlockSpec((tm, out_pad), lambda i: (i, 0))

    flops = 2 * batch_p * (in_dim * HIDDEN + 3 * HIDDEN * HIDDEN + HIDDEN * out_pad)
    bytes_accessed = (x_p.size * x_p.dtype.itemsize
                      + sum(w.size * 2 + b.size * 4 for w, b in prepped)
                      + batch_p * out_pad * 4)

    out = pl.pallas_call(
        mlp_kernel,
        out_shape=jax.ShapeDtypeStruct((batch_p, out_pad), jnp.float32),
        grid=(batch_p // tm,),
        in_specs=in_specs,
        out_specs=out_specs,
        compiler_params=pltpu.CompilerParams(
            dimension_semantics=("parallel",)),
        cost_estimate=pl.CostEstimate(
            flops=flops, transcendentals=0, bytes_accessed=bytes_accessed),
    )(*flat_args)

    return out[:batch, :out_dim]


def init_params(key, input_dim, output_dim, hidden=HIDDEN):
    """Deterministic init mimicking nn.Linear's uniform(-1/sqrt(fan_in), ...)."""
    dims = [(input_dim, hidden), (hidden, hidden), (hidden, hidden),
            (hidden, hidden), (hidden, output_dim)]
    params = []
    for (fan_in, fan_out) in dims:
        key, kw, kb = jax.random.split(key, 3)
        bound = 1.0 / jnp.sqrt(jnp.float32(fan_in))
        w = jax.random.uniform(kw, (fan_in, fan_out), jnp.float32, -bound, bound)
        b = jax.random.uniform(kb, (1, fan_out), jnp.float32, -bound, bound)
        params.append((w, b))
    return params


def reference_forward(x, params, cast_bf16):
    """Pure-JAX reference. If cast_bf16, mirrors the kernel's bf16 matmul inputs."""
    h = x.astype(jnp.float32)
    n = len(params)
    for i, (w, b) in enumerate(params):
        if cast_bf16:
            h = jnp.dot(h.astype(jnp.bfloat16), w.astype(jnp.bfloat16),
                        preferred_element_type=jnp.float32) + b
        else:
            h = h @ w + b
        if i < n - 1:
            h = jnp.where(h > 0, h, NEG_SLOPE * h)
    return h


if __name__ == "__main__":
    key = jax.random.PRNGKey(0)
    batch = 8
    input_dim = 32      # Model(input_dim=(32,), output_dim=8)
    output_dim = 8

    key, kx, kp = jax.random.split(key, 3)
    x = jax.random.normal(kx, (batch, input_dim), jnp.float32)
    params = init_params(kp, input_dim, output_dim)

    out = mlp_forward(x, params)
    out = jax.block_until_ready(out)
    assert out.shape == (batch, output_dim)

    # Tight check vs a reference with the same bf16 matmul inputs / f32 accum.
    ref_bf16 = reference_forward(x, params, cast_bf16=True)
    assert jnp.allclose(out, ref_bf16, atol=1e-2, rtol=1e-2), \
        "mismatch vs bf16-matched reference"

    # Loose sanity check vs the pure-f32 semantics of the PyTorch module.
    ref_f32 = reference_forward(x, params, cast_bf16=False)
    assert jnp.allclose(out, ref_f32, atol=1e-1, rtol=1e-1), \
        "mismatch vs f32 reference"

    print("KERNEL_OK")
</pallas_src>

<mosaic_0001>
module attributes {stable_mosaic.version = 11 : i64} {
  func.func @mlp_kernel(%arg0: i32, %arg1: memref<8x32xf32, #tpu.memory_space<vmem>>, %arg2: memref<32x256xbf16, #tpu.memory_space<vmem>>, %arg3: memref<1x256xf32, #tpu.memory_space<vmem>>, %arg4: memref<256x256xbf16, #tpu.memory_space<vmem>>, %arg5: memref<1x256xf32, #tpu.memory_space<vmem>>, %arg6: memref<256x256xbf16, #tpu.memory_space<vmem>>, %arg7: memref<1x256xf32, #tpu.memory_space<vmem>>, %arg8: memref<256x256xbf16, #tpu.memory_space<vmem>>, %arg9: memref<1x256xf32, #tpu.memory_space<vmem>>, %arg10: memref<256x128xbf16, #tpu.memory_space<vmem>>, %arg11: memref<1x128xf32, #tpu.memory_space<vmem>>, %arg12: memref<8x128xf32, #tpu.memory_space<vmem>>) attributes {dimension_semantics = [#tpu.dimension_semantics<parallel>], iteration_bounds = array<i64: 1>, scalar_prefetch = 0 : i64, scratch_operands = 0 : i64, tpu.core_type = #tpu.core_type<tc>, window_params = [{transform_indices = @transform_0, window_bounds = array<i64: 8, 32>}, {pipeline_mode = #tpu.pipeline_mode<synchronous>, transform_indices = @transform_1, window_bounds = array<i64: 32, 256>}, {pipeline_mode = #tpu.pipeline_mode<synchronous>, transform_indices = @transform_2, window_bounds = array<i64: 1, 256>}, {pipeline_mode = #tpu.pipeline_mode<synchronous>, transform_indices = @transform_3, window_bounds = array<i64: 256, 256>}, {pipeline_mode = #tpu.pipeline_mode<synchronous>, transform_indices = @transform_4, window_bounds = array<i64: 1, 256>}, {pipeline_mode = #tpu.pipeline_mode<synchronous>, transform_indices = @transform_5, window_bounds = array<i64: 256, 256>}, {pipeline_mode = #tpu.pipeline_mode<synchronous>, transform_indices = @transform_6, window_bounds = array<i64: 1, 256>}, {pipeline_mode = #tpu.pipeline_mode<synchronous>, transform_indices = @transform_7, window_bounds = array<i64: 256, 256>}, {pipeline_mode = #tpu.pipeline_mode<synchronous>, transform_indices = @transform_8, window_bounds = array<i64: 1, 256>}, {pipeline_mode = #tpu.pipeline_mode<synchronous>, transform_indices = @transform_9, window_bounds = array<i64: 256, 128>}, {pipeline_mode = #tpu.pipeline_mode<synchronous>, transform_indices = @transform_10, window_bounds = array<i64: 1, 128>}, {transform_indices = @transform_11, window_bounds = array<i64: 8, 128>}]} {
    %c0 = arith.constant 0 : index
    %c0_0 = arith.constant 0 : index
    %0 = vector.load %arg1[%c0, %c0_0] : memref<8x32xf32, #tpu.memory_space<vmem>>, vector<8x32xf32>
    %1 = arith.truncf %0 : vector<8x32xf32> to vector<8x32xbf16>
    %c0_1 = arith.constant 0 : index
    %c0_2 = arith.constant 0 : index
    %2 = vector.load %arg2[%c0_1, %c0_2] : memref<32x256xbf16, #tpu.memory_space<vmem>>, vector<32x256xbf16>
    %cst = arith.constant dense<0.000000e+00> : vector<8x256xf32>
    %3 = tpu.matmul %1, %2, %cst {dimension_numbers = #tpu.dot_dimension_numbers<[1], [0], [0], [1], [0, 0, 1, 1], [], []>} : vector<8x32xbf16>, vector<32x256xbf16>, vector<8x256xf32> -> vector<8x256xf32>
    %c0_3 = arith.constant 0 : index
    %c0_4 = arith.constant 0 : index
    %4 = vector.load %arg3[%c0_3, %c0_4] : memref<1x256xf32, #tpu.memory_space<vmem>>, vector<1x256xf32>
    %5 = vector.broadcast %4 : vector<1x256xf32> to vector<8x256xf32>
    %6 = arith.addf %3, %5 : vector<8x256xf32>
    %cst_5 = arith.constant 0.000000e+00 : f32
    %7 = vector.broadcast %cst_5 : f32 to vector<8x256xf32>
    %8 = arith.cmpf ogt, %6, %7 : vector<8x256xf32>
    %cst_6 = arith.constant 0.00999999977 : f32
    %9 = vector.broadcast %cst_6 : f32 to vector<8x256xf32>
    %10 = arith.mulf %9, %6 : vector<8x256xf32>
    %11 = arith.select %8, %6, %10 : vector<8x256xi1>, vector<8x256xf32>
    %12 = arith.truncf %11 : vector<8x256xf32> to vector<8x256xbf16>
    %c0_7 = arith.constant 0 : index
    %c0_8 = arith.constant 0 : index
    %13 = vector.load %arg4[%c0_7, %c0_8] : memref<256x256xbf16, #tpu.memory_space<vmem>>, vector<256x256xbf16>
    %cst_9 = arith.constant dense<0.000000e+00> : vector<8x256xf32>
    %14 = tpu.matmul %12, %13, %cst_9 {dimension_numbers = #tpu.dot_dimension_numbers<[1], [0], [0], [1], [0, 0, 1, 1], [], []>} : vector<8x256xbf16>, vector<256x256xbf16>, vector<8x256xf32> -> vector<8x256xf32>
    %c0_10 = arith.constant 0 : index
    %c0_11 = arith.constant 0 : index
    %15 = vector.load %arg5[%c0_10, %c0_11] : memref<1x256xf32, #tpu.memory_space<vmem>>, vector<1x256xf32>
    %16 = vector.broadcast %15 : vector<1x256xf32> to vector<8x256xf32>
    %17 = arith.addf %14, %16 : vector<8x256xf32>
    %cst_12 = arith.constant 0.000000e+00 : f32
    %18 = vector.broadcast %cst_12 : f32 to vector<8x256xf32>
    %19 = arith.cmpf ogt, %17, %18 : vector<8x256xf32>
    %cst_13 = arith.constant 0.00999999977 : f32
    %20 = vector.broadcast %cst_13 : f32 to vector<8x256xf32>
    %21 = arith.mulf %20, %17 : vector<8x256xf32>
    %22 = arith.select %19, %17, %21 : vector<8x256xi1>, vector<8x256xf32>
    %23 = arith.truncf %22 : vector<8x256xf32> to vector<8x256xbf16>
    %c0_14 = arith.constant 0 : index
    %c0_15 = arith.constant 0 : index
    %24 = vector.load %arg6[%c0_14, %c0_15] : memref<256x256xbf16, #tpu.memory_space<vmem>>, vector<256x256xbf16>
    %cst_16 = arith.constant dense<0.000000e+00> : vector<8x256xf32>
    %25 = tpu.matmul %23, %24, %cst_16 {dimension_numbers = #tpu.dot_dimension_numbers<[1], [0], [0], [1], [0, 0, 1, 1], [], []>} : vector<8x256xbf16>, vector<256x256xbf16>, vector<8x256xf32> -> vector<8x256xf32>
    %c0_17 = arith.constant 0 : index
    %c0_18 = arith.constant 0 : index
    %26 = vector.load %arg7[%c0_17, %c0_18] : memref<1x256xf32, #tpu.memory_space<vmem>>, vector<1x256xf32>
    %27 = vector.broadcast %26 : vector<1x256xf32> to vector<8x256xf32>
    %28 = arith.addf %25, %27 : vector<8x256xf32>
    %cst_19 = arith.constant 0.000000e+00 : f32
    %29 = vector.broadcast %cst_19 : f32 to vector<8x256xf32>
    %30 = arith.cmpf ogt, %28, %29 : vector<8x256xf32>
    %cst_20 = arith.constant 0.00999999977 : f32
    %31 = vector.broadcast %cst_20 : f32 to vector<8x256xf32>
    %32 = arith.mulf %31, %28 : vector<8x256xf32>
    %33 = arith.select %30, %28, %32 : vector<8x256xi1>, vector<8x256xf32>
    %34 = arith.truncf %33 : vector<8x256xf32> to vector<8x256xbf16>
    %c0_21 = arith.constant 0 : index
    %c0_22 = arith.constant 0 : index
    %35 = vector.load %arg8[%c0_21, %c0_22] : memref<256x256xbf16, #tpu.memory_space<vmem>>, vector<256x256xbf16>
    %cst_23 = arith.constant dense<0.000000e+00> : vector<8x256xf32>
    %36 = tpu.matmul %34, %35, %cst_23 {dimension_numbers = #tpu.dot_dimension_numbers<[1], [0], [0], [1], [0, 0, 1, 1], [], []>} : vector<8x256xbf16>, vector<256x256xbf16>, vector<8x256xf32> -> vector<8x256xf32>
    %c0_24 = arith.constant 0 : index
    %c0_25 = arith.constant 0 : index
    %37 = vector.load %arg9[%c0_24, %c0_25] : memref<1x256xf32, #tpu.memory_space<vmem>>, vector<1x256xf32>
    %38 = vector.broadcast %37 : vector<1x256xf32> to vector<8x256xf32>
    %39 = arith.addf %36, %38 : vector<8x256xf32>
    %cst_26 = arith.constant 0.000000e+00 : f32
    %40 = vector.broadcast %cst_26 : f32 to vector<8x256xf32>
    %41 = arith.cmpf ogt, %39, %40 : vector<8x256xf32>
    %cst_27 = arith.constant 0.00999999977 : f32
    %42 = vector.broadcast %cst_27 : f32 to vector<8x256xf32>
    %43 = arith.mulf %42, %39 : vector<8x256xf32>
    %44 = arith.select %41, %39, %43 : vector<8x256xi1>, vector<8x256xf32>
    %45 = arith.truncf %44 : vector<8x256xf32> to vector<8x256xbf16>
    %c0_28 = arith.constant 0 : index
    %c0_29 = arith.constant 0 : index
    %46 = vector.load %arg10[%c0_28, %c0_29] : memref<256x128xbf16, #tpu.memory_space<vmem>>, vector<256x128xbf16>
    %cst_30 = arith.constant dense<0.000000e+00> : vector<8x128xf32>
    %47 = tpu.matmul %45, %46, %cst_30 {dimension_numbers = #tpu.dot_dimension_numbers<[1], [0], [0], [1], [0, 0, 1, 1], [], []>} : vector<8x256xbf16>, vector<256x128xbf16>, vector<8x128xf32> -> vector<8x128xf32>
    %c0_31 = arith.constant 0 : index
    %c0_32 = arith.constant 0 : index
    %48 = vector.load %arg11[%c0_31, %c0_32] : memref<1x128xf32, #tpu.memory_space<vmem>>, vector<1x128xf32>
    %49 = vector.broadcast %48 : vector<1x128xf32> to vector<8x128xf32>
    %50 = arith.addf %47, %49 : vector<8x128xf32>
    %c0_33 = arith.constant 0 : index
    %c0_34 = arith.constant 0 : index
    %51 = vector.load %arg12[%c0_33, %c0_34] : memref<8x128xf32, #tpu.memory_space<vmem>>, vector<8x128xf32>
    tpu.vector_store %arg12[%c0_33, %c0_34], %50 {strides = array<i32>} : memref<8x128xf32, #tpu.memory_space<vmem>>, vector<8x128xf32>,
    return
  }
  func.func @transform_0(%arg0: i32) -> (i32, i32) {
    %c0_i32 = arith.constant 0 : i32
    %c0_i32_0 = arith.constant 0 : i32
    return %arg0, %c0_i32 : i32, i32
  }
  func.func @transform_1(%arg0: i32) -> (i32, i32) {
    %c0_i32 = arith.constant 0 : i32
    %c0_i32_0 = arith.constant 0 : i32
    %c0_i32_1 = arith.constant 0 : i32
    return %c0_i32, %c0_i32_0 : i32, i32
  }
  func.func @transform_2(%arg0: i32) -> (i32, i32) {
    %c0_i32 = arith.constant 0 : i32
    %c0_i32_0 = arith.constant 0 : i32
    %c0_i32_1 = arith.constant 0 : i32
    return %c0_i32, %c0_i32_0 : i32, i32
  }
  func.func @transform_3(%arg0: i32) -> (i32, i32) {
    %c0_i32 = arith.constant 0 : i32
    %c0_i32_0 = arith.constant 0 : i32
    %c0_i32_1 = arith.constant 0 : i32
    return %c0_i32, %c0_i32_0 : i32, i32
  }
  func.func @transform_4(%arg0: i32) -> (i32, i32) {
    %c0_i32 = arith.constant 0 : i32
    %c0_i32_0 = arith.constant 0 : i32
    %c0_i32_1 = arith.constant 0 : i32
    return %c0_i32, %c0_i32_0 : i32, i32
  }
  func.func @transform_5(%arg0: i32) -> (i32, i32) {
    %c0_i32 = arith.constant 0 : i32
    %c0_i32_0 = arith.constant 0 : i32
    %c0_i32_1 = arith.constant 0 : i32
    return %c0_i32, %c0_i32_0 : i32, i32
  }
  func.func @transform_6(%arg0: i32) -> (i32, i32) {
    %c0_i32 = arith.constant 0 : i32
    %c0_i32_0 = arith.constant 0 : i32
    %c0_i32_1 = arith.constant 0 : i32
    return %c0_i32, %c0_i32_0 : i32, i32
  }
  func.func @transform_7(%arg0: i32) -> (i32, i32) {
    %c0_i32 = arith.constant 0 : i32
    %c0_i32_0 = arith.constant 0 : i32
    %c0_i32_1 = arith.constant 0 : i32
    return %c0_i32, %c0_i32_0 : i32, i32
  }
  func.func @transform_8(%arg0: i32) -> (i32, i32) {
    %c0_i32 = arith.constant 0 : i32
    %c0_i32_0 = arith.constant 0 : i32
    %c0_i32_1 = arith.constant 0 : i32
    return %c0_i32, %c0_i32_0 : i32, i32
  }
  func.func @transform_9(%arg0: i32) -> (i32, i32) {
    %c0_i32 = arith.constant 0 : i32
    %c0_i32_0 = arith.constant 0 : i32
    %c0_i32_1 = arith.constant 0 : i32
    return %c0_i32, %c0_i32_0 : i32, i32
  }
  func.func @transform_10(%arg0: i32) -> (i32, i32) {
    %c0_i32 = arith.constant 0 : i32
    %c0_i32_0 = arith.constant 0 : i32
    %c0_i32_1 = arith.constant 0 : i32
    return %c0_i32, %c0_i32_0 : i32, i32
  }
  func.func @transform_11(%arg0: i32) -> (i32, i32) {
    %c0_i32 = arith.constant 0 : i32
    %c0_i32_0 = arith.constant 0 : i32
    return %arg0, %c0_i32 : i32, i32
  }
}

</mosaic_0001>

<llo_original>
// kernel: tpu_custom_call.1
$region0: #{tpu_custom_call.1}
  #allocation0 [shape = 'u32[]', space=smem, size = 0x4, offset = 0x4, fixed_abs, tag = 'smem constant byte address 0x4 - core index']
  #allocation1 [shape = 'u32[144,128]{1,0:T(1,128)}', space=vmem, size = 0x12000, scoped, tag = 'internal scratch']
  %s0 = inlined_call_operand.hbm [shape: f32[8,32], index: 0, kind: input, shape index: {}]
  %s1 = inlined_call_operand.hbm [shape: bf16[32,256], index: 1, kind: input, shape index: {}]
  %s2 = inlined_call_operand.vmem [shape: f32[1,256], index: 2, kind: input, shape index: {}]
  %s3 = inlined_call_operand.hbm [shape: bf16[256,256], index: 3, kind: input, shape index: {}]
  %s4 = inlined_call_operand.vmem [shape: f32[1,256], index: 4, kind: input, shape index: {}]
  %s5 = inlined_call_operand.hbm [shape: bf16[256,256], index: 5, kind: input, shape index: {}]
  %s6 = inlined_call_operand.vmem [shape: f32[1,256], index: 6, kind: input, shape index: {}]
  %s7 = inlined_call_operand.hbm [shape: bf16[256,256], index: 7, kind: input, shape index: {}]
  %s8 = inlined_call_operand.vmem [shape: f32[1,256], index: 8, kind: input, shape index: {}]
  %s9 = inlined_call_operand.hbm [shape: bf16[256,128], index: 9, kind: input, shape index: {}]
  %s10 = inlined_call_operand.vmem [shape: f32[1,128], index: 10, kind: input, shape index: {}]
  %s11 = inlined_call_operand.hbm [shape: f32[8,128], index: 11, kind: output, shape index: {}]
  %s12 = sld [smem:[#allocation0]]
  $region78: #{tpu_custom_call.1} parent=0
    _
  %s14 = ssub.s32 1, %s12
  %s15 = scalar_select 0, %s14, %s12
  $region1: #{tpu_custom_call.1} parent=0
    #allocation2 [shape = 'u8[4096]{0}', space=vmem, size = 0x1000, scoped, tag = 'input window, operand 0, single buffered']
    #allocation3 [shape = 's32[1]{0}', space=sflag, size = 0x4, scoped, tag = 'scoped memory for tpu_custom_call.1']
    #allocation4 [shape = 's32[1]{0}', space=sflag, size = 0x4, scoped, tag = 'scoped memory for tpu_custom_call.1']
    #allocation5 [shape = 'u8[16384]{0}', space=vmem, size = 0x4000, scoped, tag = 'input window, operand 1, single buffered']
    #allocation6 [shape = 's32[1]{0}', space=sflag, size = 0x4, scoped, tag = 'scoped memory for tpu_custom_call.1']
    #allocation7 [shape = 'u8[131072]{0}', space=vmem, size = 0x20000, scoped, tag = 'input window, operand 3, single buffered']
    #allocation8 [shape = 'u8[131072]{0}', space=vmem, size = 0x20000, scoped, tag = 'input window, operand 5, single buffered']
    #allocation9 [shape = 's32[1]{0}', space=sflag, size = 0x4, scoped, tag = 'scoped memory for tpu_custom_call.1']
    #allocation10 [shape = 'u8[131072]{0}', space=vmem, size = 0x20000, scoped, tag = 'input window, operand 7, single buffered']
    #allocation11 [shape = 'u8[65536]{0}', space=vmem, size = 0x10000, scoped, tag = 'input window, operand 9, single buffered']
    #allocation12 [shape = 's32[1]{0}', space=sflag, size = 0x4, scoped, tag = 'scoped memory for tpu_custom_call.1']
    #allocation13 [shape = 'u8[4096]{0}', space=vmem, size = 0x1000, scoped, tag = 'output window, operand 0, single buffered']
    %16 = vsyncpa [#allocation3], 0
    %17 = vsyncpa [#allocation6], 0
    %18 = vsyncpa [#allocation9], 0
    %19 = vsyncpa [#allocation12], 0
    %20 = vsyncpa [#allocation4], 0
    // Predicated region
    $region2: #{tpu_custom_call.1} parent=1 // pred_check
      _
    $region3: #{tpu_custom_call.1} parent=1 // pred_check_branch
      %22 = sbr.rel (0) target = $region5
    $region4: #{tpu_custom_call.1} parent=1 // pred_region
      %s24 = ssub.s32 128, 128
      %25 = vsyncadd [#allocation3], %s24
      %s27 = sshll.u32 [#allocation2], 4
      %s28 = int_to_ptr.vmem [resolvable:$true] %s27
      %30 = dma.hbm_to_vmem [thread:$0]  %s0, 128, %s28, [#allocation3]
    $region5: #{tpu_custom_call.1} parent=1 // pred_fallthru
      _
    // Predicated region
    $region6: #{tpu_custom_call.1} parent=1 // pred_check
      _
    $region7: #{tpu_custom_call.1} parent=1 // pred_check_branch
      %32 = sbr.rel (0) target = $region9
    $region8: #{tpu_custom_call.1} parent=1 // pred_region
      %s34 = ssub.s32 512, 512
      %35 = vsyncadd [#allocation6], %s34
      %s36 = sshll.u32 [#allocation5], 4
      %s37 = int_to_ptr.vmem [resolvable:$true] %s36
      %42 = dma.hbm_to_vmem [thread:$0]  %s1, 512, %s37, [#allocation6], 128, 128, 8
    $region9: #{tpu_custom_call.1} parent=1 // pred_fallthru
      _
    // Predicated region
    $region10: #{tpu_custom_call.1} parent=1 // pred_check
      _
    $region11: #{tpu_custom_call.1} parent=1 // pred_check_branch
      %44 = sbr.rel (0) target = $region13
    $region12: #{tpu_custom_call.1} parent=1 // pred_region
      _
    $region13: #{tpu_custom_call.1} parent=1 // pred_fallthru
      _
    // Predicated region
    $region14: #{tpu_custom_call.1} parent=1 // pred_check
      _
    $region15: #{tpu_custom_call.1} parent=1 // pred_check_branch
      %46 = sbr.rel (0) target = $region17
    $region16: #{tpu_custom_call.1} parent=1 // pred_region
      %s48 = ssub.s32 4096, 4096
      %49 = vsyncadd [#allocation6], %s48
      %s50 = sshll.u32 [#allocation7], 4
      %s51 = int_to_ptr.vmem [resolvable:$true] %s50
      %56 = dma.hbm_to_vmem [thread:$0]  %s3, 4096, %s51, [#allocation6], 128, 128, 8
    $region17: #{tpu_custom_call.1} parent=1 // pred_fallthru
      _
    // Predicated region
    $region18: #{tpu_custom_call.1} parent=1 // pred_check
      _
    $region19: #{tpu_custom_call.1} parent=1 // pred_check_branch
      %58 = sbr.rel (0) target = $region21
    $region20: #{tpu_custom_call.1} parent=1 // pred_region
      _
    $region21: #{tpu_custom_call.1} parent=1 // pred_fallthru
      _
    // Predicated region
    $region22: #{tpu_custom_call.1} parent=1 // pred_check
      _
    $region23: #{tpu_custom_call.1} parent=1 // pred_check_branch
      %60 = sbr.rel (0) target = $region25
    $region24: #{tpu_custom_call.1} parent=1 // pred_region
      %s62 = ssub.s32 4096, 4096
      %63 = vsyncadd [#allocation9], %s62
      %s64 = sshll.u32 [#allocation8], 4
      %s65 = int_to_ptr.vmem [resolvable:$true] %s64
      %70 = dma.hbm_to_vmem [thread:$0]  %s5, 4096, %s65, [#allocation9], 128, 128, 8
    $region25: #{tpu_custom_call.1} parent=1 // pred_fallthru
      _
    // Predicated region
    $region26: #{tpu_custom_call.1} parent=1 // pred_check
      _
    $region27: #{tpu_custom_call.1} parent=1 // pred_check_branch
      %72 = sbr.rel (0) target = $region29
    $region28: #{tpu_custom_call.1} parent=1 // pred_region
      _
    $region29: #{tpu_custom_call.1} parent=1 // pred_fallthru
      _
    // Predicated region
    $region30: #{tpu_custom_call.1} parent=1 // pred_check
      _
    $region31: #{tpu_custom_call.1} parent=1 // pred_check_branch
      %74 = sbr.rel (0) target = $region33
    $region32: #{tpu_custom_call.1} parent=1 // pred_region
      %s76 = ssub.s32 4096, 4096
      %77 = vsyncadd [#allocation9], %s76
      %s78 = sshll.u32 [#allocation10], 4
      %s79 = int_to_ptr.vmem [resolvable:$true] %s78
      %84 = dma.hbm_to_vmem [thread:$0]  %s7, 4096, %s79, [#allocation9], 128, 128, 8
    $region33: #{tpu_custom_call.1} parent=1 // pred_fallthru
      _
    // Predicated region
    $region34: #{tpu_custom_call.1} parent=1 // pred_check
      _
    $region35: #{tpu_custom_call.1} parent=1 // pred_check_branch
      %86 = sbr.rel (0) target = $region37
    $region36: #{tpu_custom_call.1} parent=1 // pred_region
      _
    $region37: #{tpu_custom_call.1} parent=1 // pred_fallthru
      _
    // Predicated region
    $region38: #{tpu_custom_call.1} parent=1 // pred_check
      _
    $region39: #{tpu_custom_call.1} parent=1 // pred_check_branch
      %88 = sbr.rel (0) target = $region41
    $region40: #{tpu_custom_call.1} parent=1 // pred_region
      %s90 = ssub.s32 2048, 2048
      %91 = vsyncadd [#allocation12], %s90
      %s92 = sshll.u32 [#allocation11], 4
      %s93 = int_to_ptr.vmem [resolvable:$true] %s92
      %98 = dma.hbm_to_vmem [thread:$0]  %s9, 2048, %s93, [#allocation12], 64, 64, 4
    $region41: #{tpu_custom_call.1} parent=1 // pred_fallthru
      _
    // Predicated region
    $region42: #{tpu_custom_call.1} parent=1 // pred_check
      _
    $region43: #{tpu_custom_call.1} parent=1 // pred_check_branch
      %100 = sbr.rel (0) target = $region45
    $region44: #{tpu_custom_call.1} parent=1 // pred_region
      _
    $region45: #{tpu_custom_call.1} parent=1 // pred_fallthru
      _
    // Predicated region
    $region46: #{tpu_custom_call.1} parent=1 // pred_check
      _
    $region47: #{tpu_custom_call.1} parent=1 // pred_check_branch
      %102 = sbr.rel (0) target = $region49
    $region48: #{tpu_custom_call.1} parent=1 // pred_region
      %103 = dma.done [#allocation3], 128
    $region49: #{tpu_custom_call.1} parent=1 // pred_fallthru
      _
    // Predicated region
    $region50: #{tpu_custom_call.1} parent=1 // pred_check
      _
    $region51: #{tpu_custom_call.1} parent=1 // pred_check_branch
      %105 = sbr.rel (0) target = $region53
    $region52: #{tpu_custom_call.1} parent=1 // pred_region
      %106 = dma.done [#allocation6], 512
    $region53: #{tpu_custom_call.1} parent=1 // pred_fallthru
      _
    // Predicated region
    $region54: #{tpu_custom_call.1} parent=1 // pred_check
      _
    $region55: #{tpu_custom_call.1} parent=1 // pred_check_branch
      %108 = sbr.rel (0) target = $region57
    $region56: #{tpu_custom_call.1} parent=1 // pred_region
      %109 = dma.done [#allocation6], 4096
    $region57: #{tpu_custom_call.1} parent=1 // pred_fallthru
      _
    // Predicated region
    $region58: #{tpu_custom_call.1} parent=1 // pred_check
      _
    $region59: #{tpu_custom_call.1} parent=1 // pred_check_branch
      %111 = sbr.rel (0) target = $region61
    $region60: #{tpu_custom_call.1} parent=1 // pred_region
      %112 = dma.done [#allocation9], 4096
    $region61: #{tpu_custom_call.1} parent=1 // pred_fallthru
      _
    // Predicated region
    $region62: #{tpu_custom_call.1} parent=1 // pred_check
      _
    $region63: #{tpu_custom_call.1} parent=1 // pred_check_branch
      %114 = sbr.rel (0) target = $region65
    $region64: #{tpu_custom_call.1} parent=1 // pred_region
      %115 = dma.done [#allocation9], 4096
    $region65: #{tpu_custom_call.1} parent=1 // pred_fallthru
      _
    // Predicated region
    $region66: #{tpu_custom_call.1} parent=1 // pred_check
      _
    $region67: #{tpu_custom_call.1} parent=1 // pred_check_branch
      %117 = sbr.rel (0) target = $region69
    $region68: #{tpu_custom_call.1} parent=1 // pred_region
      %118 = dma.done [#allocation12], 2048
    $region69: #{tpu_custom_call.1} parent=1 // pred_fallthru
      _
    %v120 = vld [vmem:[#allocation2] sm:$0xff]
    %v121 = vpack.c.bf16 %v120, %v120
    %v122 = vld [vmem:[#allocation5] sm:$0xff]
    %v123 = vld [vmem:[#allocation5 + $0x8] sm:$0xff]
    %v124 = vld [vmem:[#allocation5 + $0x10] sm:$0xff]
    %v125 = vld [vmem:[#allocation5 + $0x18] sm:$0xff]
    %v126 = vld [vmem:[%s2] sm:$0x3]
    %v128 = vlaneseq
    %v129 = vshrl.u32 %v128, 7
    %v130 = vsub.s32 0, %v129
    %v131 = vrot.slane %v126, %v130
    %v132 = vlaneseq
    %v133 = vshrl.u32 %v132, 7
    %v134 = vsub.s32 1, %v133
    %v135 = vrot.slane %v126, %v134
    %v142 = vunpack.c.l.b16 %v122
    %v143 = vunpack.c.h.b16 %v122
    %v144 = vunpack.c.l.b16 %v123
    %v145 = vunpack.c.h.b16 %v123
    %v146 = vunpack.c.l.b16 %v124
    %v147 = vunpack.c.h.b16 %v124
    %v148 = vunpack.c.l.b16 %v125
    %v149 = vunpack.c.h.b16 %v125
    %v150 = vpack.c.b16 %v144, %v142
    %v151 = vpack.c.b16 %v145, %v143
    %v152 = vpack.c.b16 %v148, %v146
    %v153 = vpack.c.b16 %v149, %v147
    %vm158 = vcmask 261120
    %v160 = vsel %vm158, %v121, 0
    %162 = vmatprep.subr.bf16.mxu0 0
    %163 = vmatpush1.bf16.msra.mxu0 0
    %164 = vmatprep.subr.bf16.mxu0 0
    %165 = vmatpush1.bf16.msra.mxu0 0
    %166 = vmatprep.subr.bf16.mxu0 0
    %167 = vmatpush1.bf16.msra.mxu0 0
    %168 = vmatprep.subr.bf16.mxu0 0
    %169 = vmatpush1.bf16.msra.mxu0 0
    %170 = vmatprep.subr.bf16.mxu0 0
    %171 = vmatpush1.bf16.msra.mxu0 0
    %172 = vmatprep.subr.bf16.mxu0 0
    %173 = vmatpush1.bf16.msra.mxu0 0
    %174 = vmatprep.subr.bf16.mxu0 %v153
    %175 = vmatpush1.bf16.msra.mxu0 %v152
    %176 = vmatprep.subr.bf16.mxu0 %v151
    %177 = vmatpush1.bf16.msra.mxu0 %v150
    %178 = vmatprep.subr.bf16.mxu0 0
    %179 = vmatpush2.bf16.msra.mxu0 0
    %180 = vmatprep.subr.bf16.mxu0 0
    %181 = vmatpush2.bf16.msra.mxu0 0
    %182 = vmatprep.subr.bf16.mxu0 0
    %183 = vmatpush2.bf16.msra.mxu0 0
    %184 = vmatprep.subr.bf16.mxu0 0
    %185 = vmatpush2.bf16.msra.mxu0 0
    %186 = vmatprep.subr.bf16.mxu0 0
    %187 = vmatpush2.bf16.msra.mxu0 0
    %188 = vmatprep.subr.bf16.mxu0 0
    %189 = vmatpush2.bf16.msra.mxu0 0
    %190 = vmatprep.subr.bf16.mxu0 0
    %191 = vmatpush2.bf16.msra.mxu0 0
    %192 = vmatprep.subr.bf16.mxu0 0
    %193 = vmatpush2.bf16.msra.mxu0 0
    %194 = vmatprep.mubr.bf16.mxu0 0
    %195 = vmatmul.mubr.bf16.gmra.mxu0 %v160
    %v196 = vpop.f32.mrf.mxu0
    %v197 = vadd.f32 %v131, %v196
    %v198 = vpop.f32.mrf.mxu0
    %v199 = vadd.f32 %v135, %v198
    %v200 = vpop.f32.mrf.mxu0
    %v201 = vpop.f32.mrf.mxu0
    %202 = vdwg.mxu0
    %vm203 = vcmp.gt.f32.partialorder %v197, 0.0
    %vm204 = vcmp.gt.f32.partialorder %v199, 0.0
    %v205 = vmul.f32 %v197, 0.01
    %v206 = vmul.f32 %v199, 0.01
    %v207 = vsel %vm203, %v197, %v205
    %v208 = vsel %vm204, %v199, %v206
    %v209 = vpack.c.bf16 %v207, %v207
    %v210 = vpack.c.bf16 %v208, %v208
    %v211 = vld [vmem:[#allocation7] sm:$0xff]
    %v212 = vld [vmem:[#allocation7 + $0x8] sm:$0xff]
    %v213 = vld [vmem:[#allocation7 + $0x10] sm:$0xff]
    %v214 = vld [vmem:[#allocation7 + $0x18] sm:$0xff]
    %v215 = vld [vmem:[#allocation7 + $0x20] sm:$0xff]
    %v216 = vld [vmem:[#allocation7 + $0x28] sm:$0xff]
    %v217 = vld [vmem:[#allocation7 + $0x30] sm:$0xff]
    %v218 = vld [vmem:[#allocation7 + $0x38] sm:$0xff]
    %v219 = vld [vmem:[#allocation7 + $0x40] sm:$0xff]
    %v220 = vld [vmem:[#allocation7 + $0x48] sm:$0xff]
    %v221 = vld [vmem:[#allocation7 + $0x50] sm:$0xff]
    %v222 = vld [vmem:[#allocation7 + $0x58] sm:$0xff]
    %v223 = vld [vmem:[#allocation7 + $0x60] sm:$0xff]
    %v224 = vld [vmem:[#allocation7 + $0x68] sm:$0xff]
    %v225 = vld [vmem:[#allocation7 + $0x70] sm:$0xff]
    %v226 = vld [vmem:[#allocation7 + $0x78] sm:$0xff]
    %v227 = vld [vmem:[#allocation7 + $0x80] sm:$0xff]
    %v228 = vld [vmem:[#allocation7 + $0x88] sm:$0xff]
    %v229 = vld [vmem:[#allocation7 + $0x90] sm:$0xff]
    %v230 = vld [vmem:[#allocation7 + $0x98] sm:$0xff]
    %v231 = vld [vmem:[#allocation7 + $0xa0] sm:$0xff]
    %v232 = vld [vmem:[#allocation7 + $0xa8] sm:$0xff]
    %v233 = vld [vmem:[#allocation7 + $0xb0] sm:$0xff]
    %v234 = vld [vmem:[#allocation7 + $0xb8] sm:$0xff]
    %v235 = vld [vmem:[#allocation7 + $0xc0] sm:$0xff]
    %v236 = vld [vmem:[#allocation7 + $0xc8] sm:$0xff]
    %v237 = vld [vmem:[#allocation7 + $0xd0] sm:$0xff]
    %v238 = vld [vmem:[#allocation7 + $0xd8] sm:$0xff]
    %v239 = vld [vmem:[#allocation7 + $0xe0] sm:$0xff]
    %v240 = vld [vmem:[#allocation7 + $0xe8] sm:$0xff]
    %v241 = vld [vmem:[#allocation7 + $0xf0] sm:$0xff]
    %v242 = vld [vmem:[#allocation7 + $0xf8] sm:$0xff]
    %v243 = vld [vmem:[%s4] sm:$0x3]
    %v245 = vlaneseq
    %v246 = vshrl.u32 %v245, 7
    %v247 = vsub.s32 0, %v246
    %v248 = vrot.slane %v243, %v247
    %v249 = vlaneseq
    %v250 = vshrl.u32 %v249, 7
    %v251 = vsub.s32 1, %v250
    %v252 = vrot.slane %v243, %v251
    %v287 = vunpack.c.l.b16 %v211
    %v288 = vunpack.c.h.b16 %v211
    %v289 = vunpack.c.l.b16 %v212
    %v290 = vunpack.c.h.b16 %v212
    %v291 = vunpack.c.l.b16 %v213
    %v292 = vunpack.c.h.b16 %v213
    %v293 = vunpack.c.l.b16 %v214
    %v294 = vunpack.c.h.b16 %v214
    %v295 = vunpack.c.l.b16 %v215
    %v296 = vunpack.c.h.b16 %v215
    %v297 = vunpack.c.l.b16 %v216
    %v298 = vunpack.c.h.b16 %v216
    %v299 = vunpack.c.l.b16 %v217
    %v300 = vunpack.c.h.b16 %v217
    %v301 = vunpack.c.l.b16 %v218
    %v302 = vunpack.c.h.b16 %v218
    %v303 = vunpack.c.l.b16 %v219
    %v304 = vunpack.c.h.b16 %v219
    %v305 = vunpack.c.l.b16 %v220
    %v306 = vunpack.c.h.b16 %v220
    %v307 = vunpack.c.l.b16 %v221
    %v308 = vunpack.c.h.b16 %v221
    %v309 = vunpack.c.l.b16 %v222
    %v310 = vunpack.c.h.b16 %v222
    %v311 = vunpack.c.l.b16 %v223
    %v312 = vunpack.c.h.b16 %v223
    %v313 = vunpack.c.l.b16 %v224
    %v314 = vunpack.c.h.b16 %v224
    %v315 = vunpack.c.l.b16 %v225
    %v316 = vunpack.c.h.b16 %v225
    %v317 = vunpack.c.l.b16 %v226
    %v318 = vunpack.c.h.b16 %v226
    %v319 = vunpack.c.l.b16 %v227
    %v320 = vunpack.c.h.b16 %v227
    %v321 = vunpack.c.l.b16 %v228
    %v322 = vunpack.c.h.b16 %v228
    %v323 = vunpack.c.l.b16 %v229
    %v324 = vunpack.c.h.b16 %v229
    %v325 = vunpack.c.l.b16 %v230
    %v326 = vunpack.c.h.b16 %v230
    %v327 = vunpack.c.l.b16 %v231
    %v328 = vunpack.c.h.b16 %v231
    %v329 = vunpack.c.l.b16 %v232
    %v330 = vunpack.c.h.b16 %v232
    %v331 = vunpack.c.l.b16 %v233
    %v332 = vunpack.c.h.b16 %v233
    %v333 = vunpack.c.l.b16 %v234
    %v334 = vunpack.c.h.b16 %v234
    %v335 = vunpack.c.l.b16 %v235
    %v336 = vunpack.c.h.b16 %v235
    %v337 = vunpack.c.l.b16 %v236
    %v338 = vunpack.c.h.b16 %v236
    %v339 = vunpack.c.l.b16 %v237
    %v340 = vunpack.c.h.b16 %v237
    %v341 = vunpack.c.l.b16 %v238
    %v342 = vunpack.c.h.b16 %v238
    %v343 = vunpack.c.l.b16 %v239
    %v344 = vunpack.c.h.b16 %v239
    %v345 = vunpack.c.l.b16 %v240
    %v346 = vunpack.c.h.b16 %v240
    %v347 = vunpack.c.l.b16 %v241
    %v348 = vunpack.c.h.b16 %v241
    %v349 = vunpack.c.l.b16 %v242
    %v350 = vunpack.c.h.b16 %v242
    %v351 = vpack.c.b16 %v289, %v287
    %v352 = vpack.c.b16 %v290, %v288
    %v353 = vpack.c.b16 %v293, %v291
    %v354 = vpack.c.b16 %v294, %v292
    %v355 = vpack.c.b16 %v297, %v295
    %v356 = vpack.c.b16 %v298, %v296
    %v357 = vpack.c.b16 %v301, %v299
    %v358 = vpack.c.b16 %v302, %v300
    %v359 = vpack.c.b16 %v305, %v303
    %v360 = vpack.c.b16 %v306, %v304
    %v361 = vpack.c.b16 %v309, %v307
    %v362 = vpack.c.b16 %v310, %v308
    %v363 = vpack.c.b16 %v313, %v311
    %v364 = vpack.c.b16 %v314, %v312
    %v365 = vpack.c.b16 %v317, %v315
    %v366 = vpack.c.b16 %v318, %v316
    %v367 = vpack.c.b16 %v321, %v319
    %v368 = vpack.c.b16 %v322, %v320
    %v369 = vpack.c.b16 %v325, %v323
    %v370 = vpack.c.b16 %v326, %v324
    %v371 = vpack.c.b16 %v329, %v327
    %v372 = vpack.c.b16 %v330, %v328
    %v373 = vpack.c.b16 %v333, %v331
    %v374 = vpack.c.b16 %v334, %v332
    %v375 = vpack.c.b16 %v337, %v335
    %v376 = vpack.c.b16 %v338, %v336
    %v377 = vpack.c.b16 %v341, %v339
    %v378 = vpack.c.b16 %v342, %v340
    %v379 = vpack.c.b16 %v345, %v343
    %v380 = vpack.c.b16 %v346, %v344
    %v381 = vpack.c.b16 %v349, %v347
    %v382 = vpack.c.b16 %v350, %v348
    %415 = vmatprep.subr.bf16.mxu0 %v366
    %416 = vmatpush1.bf16.msra.mxu0 %v365
    %417 = vmatprep.subr.bf16.mxu0 %v364
    %418 = vmatpush1.bf16.msra.mxu0 %v363
    %419 = vmatprep.subr.bf16.mxu0 %v362
    %420 = vmatpush1.bf16.msra.mxu0 %v361
    %421 = vmatprep.subr.bf16.mxu0 %v360
    %422 = vmatpush1.bf16.msra.mxu0 %v359
    %423 = vmatprep.subr.bf16.mxu0 %v358
    %424 = vmatpush1.bf16.msra.mxu0 %v357
    %425 = vmatprep.subr.bf16.mxu0 %v356
    %426 = vmatpush1.bf16.msra.mxu0 %v355
    %427 = vmatprep.subr.bf16.mxu0 %v354
    %428 = vmatpush1.bf16.msra.mxu0 %v353
    %429 = vmatprep.subr.bf16.mxu0 %v352
    %430 = vmatpush1.bf16.msra.mxu0 %v351
    %431 = vmatprep.subr.bf16.mxu0 %v382
    %432 = vmatpush2.bf16.msra.mxu0 %v381
    %433 = vmatprep.subr.bf16.mxu0 %v380
    %434 = vmatpush2.bf16.msra.mxu0 %v379
    %435 = vmatprep.subr.bf16.mxu0 %v378
    %436 = vmatpush2.bf16.msra.mxu0 %v377
    %437 = vmatprep.subr.bf16.mxu0 %v376
    %438 = vmatpush2.bf16.msra.mxu0 %v375
    %439 = vmatprep.subr.bf16.mxu0 %v374
    %440 = vmatpush2.bf16.msra.mxu0 %v373
    %441 = vmatprep.subr.bf16.mxu0 %v372
    %442 = vmatpush2.bf16.msra.mxu0 %v371
    %443 = vmatprep.subr.bf16.mxu0 %v370
    %444 = vmatpush2.bf16.msra.mxu0 %v369
    %445 = vmatprep.subr.bf16.mxu0 %v368
    %446 = vmatpush2.bf16.msra.mxu0 %v367
    %447 = vmatprep.mubr.bf16.mxu0 %v210
    %448 = vmatmul.mubr.bf16.gmra.mxu0 %v209
    %v449 = vpop.f32.mrf.mxu0
    %v450 = vadd.f32 %v248, %v449
    %v451 = vpop.f32.mrf.mxu0
    %v452 = vadd.f32 %v252, %v451
    %v453 = vpop.f32.mrf.mxu0
    %v454 = vpop.f32.mrf.mxu0
    %455 = vdwg.mxu0
    %vm456 = vcmp.gt.f32.partialorder %v450, 0.0
    %vm457 = vcmp.gt.f32.partialorder %v452, 0.0
    %v458 = vmul.f32 %v450, 0.01
    %v459 = vmul.f32 %v452, 0.01
    %v460 = vsel %vm456, %v450, %v458
    %v461 = vsel %vm457, %v452, %v459
    %v462 = vpack.c.bf16 %v460, %v460
    %v463 = vpack.c.bf16 %v461, %v461
    %v464 = vld [vmem:[#allocation8] sm:$0xff]
    %v465 = vld [vmem:[#allocation8 + $0x8] sm:$0xff]
    %v466 = vld [vmem:[#allocation8 + $0x10] sm:$0xff]
    %v467 = vld [vmem:[#allocation8 + $0x18] sm:$0xff]
    %v468 = vld [vmem:[#allocation8 + $0x20] sm:$0xff]
    %v469 = vld [vmem:[#allocation8 + $0x28] sm:$0xff]
    %v470 = vld [vmem:[#allocation8 + $0x30] sm:$0xff]
    %v471 = vld [vmem:[#allocation8 + $0x38] sm:$0xff]
    %v472 = vld [vmem:[#allocation8 + $0x40] sm:$0xff]
    %v473 = vld [vmem:[#allocation8 + $0x48] sm:$0xff]
    %v474 = vld [vmem:[#allocation8 + $0x50] sm:$0xff]
    %v475 = vld [vmem:[#allocation8 + $0x58] sm:$0xff]
    %v476 = vld [vmem:[#allocation8 + $0x60] sm:$0xff]
    %v477 = vld [vmem:[#allocation8 + $0x68] sm:$0xff]
    %v478 = vld [vmem:[#allocation8 + $0x70] sm:$0xff]
    %v479 = vld [vmem:[#allocation8 + $0x78] sm:$0xff]
    %v480 = vld [vmem:[#allocation8 + $0x80] sm:$0xff]
    %v481 = vld [vmem:[#allocation8 + $0x88] sm:$0xff]
    %v482 = vld [vmem:[#allocation8 + $0x90] sm:$0xff]
    %v483 = vld [vmem:[#allocation8 + $0x98] sm:$0xff]
    %v484 = vld [vmem:[#allocation8 + $0xa0] sm:$0xff]
    %v485 = vld [vmem:[#allocation8 + $0xa8] sm:$0xff]
    %v486 = vld [vmem:[#allocation8 + $0xb0] sm:$0xff]
    %v487 = vld [vmem:[#allocation8 + $0xb8] sm:$0xff]
    %v488 = vld [vmem:[#allocation8 + $0xc0] sm:$0xff]
    %v489 = vld [vmem:[#allocation8 + $0xc8] sm:$0xff]
    %v490 = vld [vmem:[#allocation8 + $0xd0] sm:$0xff]
    %v491 = vld [vmem:[#allocation8 + $0xd8] sm:$0xff]
    %v492 = vld [vmem:[#allocation8 + $0xe0] sm:$0xff]
    %v493 = vld [vmem:[#allocation8 + $0xe8] sm:$0xff]
    %v494 = vld [vmem:[#allocation8 + $0xf0] sm:$0xff]
    %v495 = vld [vmem:[#allocation8 + $0xf8] sm:$0xff]
    %v496 = vld [vmem:[%s6] sm:$0x3]
    %v498 = vlaneseq
    %v499 = vshrl.u32 %v498, 7
    %v500 = vsub.s32 0, %v499
    %v501 = vrot.slane %v496, %v500
    %v502 = vlaneseq
    %v503 = vshrl.u32 %v502, 7
    %v504 = vsub.s32 1, %v503
    %v505 = vrot.slane %v496, %v504
    %v540 = vunpack.c.l.b16 %v464
    %v541 = vunpack.c.h.b16 %v464
    %v542 = vunpack.c.l.b16 %v465
    %v543 = vunpack.c.h.b16 %v465
    %v544 = vunpack.c.l.b16 %v466
    %v545 = vunpack.c.h.b16 %v466
    %v546 = vunpack.c.l.b16 %v467
    %v547 = vunpack.c.h.b16 %v467
    %v548 = vunpack.c.l.b16 %v468
    %v549 = vunpack.c.h.b16 %v468
    %v550 = vunpack.c.l.b16 %v469
    %v551 = vunpack.c.h.b16 %v469
    %v552 = vunpack.c.l.b16 %v470
    %v553 = vunpack.c.h.b16 %v470
    %v554 = vunpack.c.l.b16 %v471
    %v555 = vunpack.c.h.b16 %v471
    %v556 = vunpack.c.l.b16 %v472
    %v557 = vunpack.c.h.b16 %v472
    %v558 = vunpack.c.l.b16 %v473
    %v559 = vunpack.c.h.b16 %v473
    %v560 = vunpack.c.l.b16 %v474
    %v561 = vunpack.c.h.b16 %v474
    %v562 = vunpack.c.l.b16 %v475
    %v563 = vunpack.c.h.b16 %v475
    %v564 = vunpack.c.l.b16 %v476
    %v565 = vunpack.c.h.b16 %v476
    %v566 = vunpack.c.l.b16 %v477
    %v567 = vunpack.c.h.b16 %v477
    %v568 = vunpack.c.l.b16 %v478
    %v569 = vunpack.c.h.b16 %v478
    %v570 = vunpack.c.l.b16 %v479
    %v571 = vunpack.c.h.b16 %v479
    %v572 = vunpack.c.l.b16 %v480
    %v573 = vunpack.c.h.b16 %v480
    %v574 = vunpack.c.l.b16 %v481
    %v575 = vunpack.c.h.b16 %v481
    %v576 = vunpack.c.l.b16 %v482
    %v577 = vunpack.c.h.b16 %v482
    %v578 = vunpack.c.l.b16 %v483
    %v579 = vunpack.c.h.b16 %v483
    %v580 = vunpack.c.l.b16 %v484
    %v581 = vunpack.c.h.b16 %v484
    %v582 = vunpack.c.l.b16 %v485
    %v583 = vunpack.c.h.b16 %v485
    %v584 = vunpack.c.l.b16 %v486
    %v585 = vunpack.c.h.b16 %v486
    %v586 = vunpack.c.l.b16 %v487
    %v587 = vunpack.c.h.b16 %v487
    %v588 = vunpack.c.l.b16 %v488
    %v589 = vunpack.c.h.b16 %v488
    %v590 = vunpack.c.l.b16 %v489
    %v591 = vunpack.c.h.b16 %v489
    %v592 = vunpack.c.l.b16 %v490
    %v593 = vunpack.c.h.b16 %v490
    %v594 = vunpack.c.l.b16 %v491
    %v595 = vunpack.c.h.b16 %v491
    %v596 = vunpack.c.l.b16 %v492
    %v597 = vunpack.c.h.b16 %v492
    %v598 = vunpack.c.l.b16 %v493
    %v599 = vunpack.c.h.b16 %v493
    %v600 = vunpack.c.l.b16 %v494
    %v601 = vunpack.c.h.b16 %v494
    %v602 = vunpack.c.l.b16 %v495
    %v603 = vunpack.c.h.b16 %v495
    %v604 = vpack.c.b16 %v542, %v540
    %v605 = vpack.c.b16 %v543, %v541
    %v606 = vpack.c.b16 %v546, %v544
    %v607 = vpack.c.b16 %v547, %v545
    %v608 = vpack.c.b16 %v550, %v548
    %v609 = vpack.c.b16 %v551, %v549
    %v610 = vpack.c.b16 %v554, %v552
    %v611 = vpack.c.b16 %v555, %v553
    %v612 = vpack.c.b16 %v558, %v556
    %v613 = vpack.c.b16 %v559, %v557
    %v614 = vpack.c.b16 %v562, %v560
    %v615 = vpack.c.b16 %v563, %v561
    %v616 = vpack.c.b16 %v566, %v564
    %v617 = vpack.c.b16 %v567, %v565
    %v618 = vpack.c.b16 %v570, %v568
    %v619 = vpack.c.b16 %v571, %v569
    %v620 = vpack.c.b16 %v574, %v572
    %v621 = vpack.c.b16 %v575, %v573
    %v622 = vpack.c.b16 %v578, %v576
    %v623 = vpack.c.b16 %v579, %v577
    %v624 = vpack.c.b16 %v582, %v580
    %v625 = vpack.c.b16 %v583, %v581
    %v626 = vpack.c.b16 %v586, %v584
    %v627 = vpack.c.b16 %v587, %v585
    %v628 = vpack.c.b16 %v590, %v588
    %v629 = vpack.c.b16 %v591, %v589
    %v630 = vpack.c.b16 %v594, %v592
    %v631 = vpack.c.b16 %v595, %v593
    %v632 = vpack.c.b16 %v598, %v596
    %v633 = vpack.c.b16 %v599, %v597
    %v634 = vpack.c.b16 %v602, %v600
    %v635 = vpack.c.b16 %v603, %v601
    %668 = vmatprep.subr.bf16.mxu0 %v619
    %669 = vmatpush1.bf16.msra.mxu0 %v618
    %670 = vmatprep.subr.bf16.mxu0 %v617
    %671 = vmatpush1.bf16.msra.mxu0 %v616
    %672 = vmatprep.subr.bf16.mxu0 %v615
    %673 = vmatpush1.bf16.msra.mxu0 %v614
    %674 = vmatprep.subr.bf16.mxu0 %v613
    %675 = vmatpush1.bf16.msra.mxu0 %v612
    %676 = vmatprep.subr.bf16.mxu0 %v611
    %677 = vmatpush1.bf16.msra.mxu0 %v610
    %678 = vmatprep.subr.bf16.mxu0 %v609
    %679 = vmatpush1.bf16.msra.mxu0 %v608
    %680 = vmatprep.subr.bf16.mxu0 %v607
    %681 = vmatpush1.bf16.msra.mxu0 %v606
    %682 = vmatprep.subr.bf16.mxu0 %v605
    %683 = vmatpush1.bf16.msra.mxu0 %v604
    %684 = vmatprep.subr.bf16.mxu0 %v635
    %685 = vmatpush2.bf16.msra.mxu0 %v634
    %686 = vmatprep.subr.bf16.mxu0 %v633
    %687 = vmatpush2.bf16.msra.mxu0 %v632
    %688 = vmatprep.subr.bf16.mxu0 %v631
    %689 = vmatpush2.bf16.msra.mxu0 %v630
    %690 = vmatprep.subr.bf16.mxu0 %v629
    %691 = vmatpush2.bf16.msra.mxu0 %v628
    %692 = vmatprep.subr.bf16.mxu0 %v627
    %693 = vmatpush2.bf16.msra.mxu0 %v626
    %694 = vmatprep.subr.bf16.mxu0 %v625
    %695 = vmatpush2.bf16.msra.mxu0 %v624
    %696 = vmatprep.subr.bf16.mxu0 %v623
    %697 = vmatpush2.bf16.msra.mxu0 %v622
    %698 = vmatprep.subr.bf16.mxu0 %v621
    %699 = vmatpush2.bf16.msra.mxu0 %v620
    %700 = vmatprep.mubr.bf16.mxu0 %v463
    %701 = vmatmul.mubr.bf16.gmra.mxu0 %v462
    %v702 = vpop.f32.mrf.mxu0
    %v703 = vadd.f32 %v501, %v702
    %v704 = vpop.f32.mrf.mxu0
    %v705 = vadd.f32 %v505, %v704
    %v706 = vpop.f32.mrf.mxu0
    %v707 = vpop.f32.mrf.mxu0
    %708 = vdwg.mxu0
    %vm709 = vcmp.gt.f32.partialorder %v703, 0.0
    %vm710 = vcmp.gt.f32.partialorder %v705, 0.0
    %v711 = vmul.f32 %v703, 0.01
    %v712 = vmul.f32 %v705, 0.01
    %v713 = vsel %vm709, %v703, %v711
    %v714 = vsel %vm710, %v705, %v712
    %v715 = vpack.c.bf16 %v713, %v713
    %v716 = vpack.c.bf16 %v714, %v714
    %v717 = vld [vmem:[#allocation10] sm:$0xff]
    %v718 = vld [vmem:[#allocation10 + $0x8] sm:$0xff]
    %v719 = vld [vmem:[#allocation10 + $0x10] sm:$0xff]
    %v720 = vld [vmem:[#allocation10 + $0x18] sm:$0xff]
    %v721 = vld [vmem:[#allocation10 + $0x20] sm:$0xff]
    %v722 = vld [vmem:[#allocation10 + $0x28] sm:$0xff]
    %v723 = vld [vmem:[#allocation10 + $0x30] sm:$0xff]
    %v724 = vld [vmem:[#allocation10 + $0x38] sm:$0xff]
    %v725 = vld [vmem:[#allocation10 + $0x40] sm:$0xff]
    %v726 = vld [vmem:[#allocation10 + $0x48] sm:$0xff]
    %v727 = vld [vmem:[#allocation10 + $0x50] sm:$0xff]
    %v728 = vld [vmem:[#allocation10 + $0x58] sm:$0xff]
    %v729 = vld [vmem:[#allocation10 + $0x60] sm:$0xff]
    %v730 = vld [vmem:[#allocation10 + $0x68] sm:$0xff]
    %v731 = vld [vmem:[#allocation10 + $0x70] sm:$0xff]
    %v732 = vld [vmem:[#allocation10 + $0x78] sm:$0xff]
    %v733 = vld [vmem:[#allocation10 + $0x80] sm:$0xff]
    %v734 = vld [vmem:[#allocation10 + $0x88] sm:$0xff]
    %v735 = vld [vmem:[#allocation10 + $0x90] sm:$0xff]
    %v736 = vld [vmem:[#allocation10 + $0x98] sm:$0xff]
    %v737 = vld [vmem:[#allocation10 + $0xa0] sm:$0xff]
    %v738 = vld [vmem:[#allocation10 + $0xa8] sm:$0xff]
    %v739 = vld [vmem:[#allocation10 + $0xb0] sm:$0xff]
    %v740 = vld [vmem:[#allocation10 + $0xb8] sm:$0xff]
    %v741 = vld [vmem:[#allocation10 + $0xc0] sm:$0xff]
    %v742 = vld [vmem:[#allocation10 + $0xc8] sm:$0xff]
    %v743 = vld [vmem:[#allocation10 + $0xd0] sm:$0xff]
    %v744 = vld [vmem:[#allocation10 + $0xd8] sm:$0xff]
    %v745 = vld [vmem:[#allocation10 + $0xe0] sm:$0xff]
    %v746 = vld [vmem:[#allocation10 + $0xe8] sm:$0xff]
    %v747 = vld [vmem:[#allocation10 + $0xf0] sm:$0xff]
    %v748 = vld [vmem:[#allocation10 + $0xf8] sm:$0xff]
    %v749 = vld [vmem:[%s8] sm:$0x3]
    %v751 = vlaneseq
    %v752 = vshrl.u32 %v751, 7
    %v753 = vsub.s32 0, %v752
    %v754 = vrot.slane %v749, %v753
    %v755 = vlaneseq
    %v756 = vshrl.u32 %v755, 7
    %v757 = vsub.s32 1, %v756
    %v758 = vrot.slane %v749, %v757
    %v793 = vunpack.c.l.b16 %v717
    %v794 = vunpack.c.h.b16 %v717
    %v795 = vunpack.c.l.b16 %v718
    %v796 = vunpack.c.h.b16 %v718
    %v797 = vunpack.c.l.b16 %v719
    %v798 = vunpack.c.h.b16 %v719
    %v799 = vunpack.c.l.b16 %v720
    %v800 = vunpack.c.h.b16 %v720
    %v801 = vunpack.c.l.b16 %v721
    %v802 = vunpack.c.h.b16 %v721
    %v803 = vunpack.c.l.b16 %v722
    %v804 = vunpack.c.h.b16 %v722
    %v805 = vunpack.c.l.b16 %v723
    %v806 = vunpack.c.h.b16 %v723
    %v807 = vunpack.c.l.b16 %v724
    %v808 = vunpack.c.h.b16 %v724
    %v809 = vunpack.c.l.b16 %v725
    %v810 = vunpack.c.h.b16 %v725
    %v811 = vunpack.c.l.b16 %v726
    %v812 = vunpack.c.h.b16 %v726
    %v813 = vunpack.c.l.b16 %v727
    %v814 = vunpack.c.h.b16 %v727
    %v815 = vunpack.c.l.b16 %v728
    %v816 = vunpack.c.h.b16 %v728
    %v817 = vunpack.c.l.b16 %v729
    %v818 = vunpack.c.h.b16 %v729
    %v819 = vunpack.c.l.b16 %v730
    %v820 = vunpack.c.h.b16 %v730
    %v821 = vunpack.c.l.b16 %v731
    %v822 = vunpack.c.h.b16 %v731
    %v823 = vunpack.c.l.b16 %v732
    %v824 = vunpack.c.h.b16 %v732
    %v825 = vunpack.c.l.b16 %v733
    %v826 = vunpack.c.h.b16 %v733
    %v827 = vunpack.c.l.b16 %v734
    %v828 = vunpack.c.h.b16 %v734
    %v829 = vunpack.c.l.b16 %v735
    %v830 = vunpack.c.h.b16 %v735
    %v831 = vunpack.c.l.b16 %v736
    %v832 = vunpack.c.h.b16 %v736
    %v833 = vunpack.c.l.b16 %v737
    %v834 = vunpack.c.h.b16 %v737
    %v835 = vunpack.c.l.b16 %v738
    %v836 = vunpack.c.h.b16 %v738
    %v837 = vunpack.c.l.b16 %v739
    %v838 = vunpack.c.h.b16 %v739
    %v839 = vunpack.c.l.b16 %v740
    %v840 = vunpack.c.h.b16 %v740
    %v841 = vunpack.c.l.b16 %v741
    %v842 = vunpack.c.h.b16 %v741
    %v843 = vunpack.c.l.b16 %v742
    %v844 = vunpack.c.h.b16 %v742
    %v845 = vunpack.c.l.b16 %v743
    %v846 = vunpack.c.h.b16 %v743
    %v847 = vunpack.c.l.b16 %v744
    %v848 = vunpack.c.h.b16 %v744
    %v849 = vunpack.c.l.b16 %v745
    %v850 = vunpack.c.h.b16 %v745
    %v851 = vunpack.c.l.b16 %v746
    %v852 = vunpack.c.h.b16 %v746
    %v853 = vunpack.c.l.b16 %v747
    %v854 = vunpack.c.h.b16 %v747
    %v855 = vunpack.c.l.b16 %v748
    %v856 = vunpack.c.h.b16 %v748
    %v857 = vpack.c.b16 %v795, %v793
    %v858 = vpack.c.b16 %v796, %v794
    %v859 = vpack.c.b16 %v799, %v797
    %v860 = vpack.c.b16 %v800, %v798
    %v861 = vpack.c.b16 %v803, %v801
    %v862 = vpack.c.b16 %v804, %v802
    %v863 = vpack.c.b16 %v807, %v805
    %v864 = vpack.c.b16 %v808, %v806
    %v865 = vpack.c.b16 %v811, %v809
    %v866 = vpack.c.b16 %v812, %v810
    %v867 = vpack.c.b16 %v815, %v813
    %v868 = vpack.c.b16 %v816, %v814
    %v869 = vpack.c.b16 %v819, %v817
    %v870 = vpack.c.b16 %v820, %v818
    %v871 = vpack.c.b16 %v823, %v821
    %v872 = vpack.c.b16 %v824, %v822
    %v873 = vpack.c.b16 %v827, %v825
    %v874 = vpack.c.b16 %v828, %v826
    %v875 = vpack.c.b16 %v831, %v829
    %v876 = vpack.c.b16 %v832, %v830
    %v877 = vpack.c.b16 %v835, %v833
    %v878 = vpack.c.b16 %v836, %v834
    %v879 = vpack.c.b16 %v839, %v837
    %v880 = vpack.c.b16 %v840, %v838
    %v881 = vpack.c.b16 %v843, %v841
    %v882 = vpack.c.b16 %v844, %v842
    %v883 = vpack.c.b16 %v847, %v845
    %v884 = vpack.c.b16 %v848, %v846
    %v885 = vpack.c.b16 %v851, %v849
    %v886 = vpack.c.b16 %v852, %v850
    %v887 = vpack.c.b16 %v855, %v853
    %v888 = vpack.c.b16 %v856, %v854
    %921 = vmatprep.subr.bf16.mxu0 %v872
    %922 = vmatpush1.bf16.msra.mxu0 %v871
    %923 = vmatprep.subr.bf16.mxu0 %v870
    %924 = vmatpush1.bf16.msra.mxu0 %v869
    %925 = vmatprep.subr.bf16.mxu0 %v868
    %926 = vmatpush1.bf16.msra.mxu0 %v867
    %927 = vmatprep.subr.bf16.mxu0 %v866
    %928 = vmatpush1.bf16.msra.mxu0 %v865
    %929 = vmatprep.subr.bf16.mxu0 %v864
    %930 = vmatpush1.bf16.msra.mxu0 %v863
    %931 = vmatprep.subr.bf16.mxu0 %v862
    %932 = vmatpush1.bf16.msra.mxu0 %v861
    %933 = vmatprep.subr.bf16.mxu0 %v860
    %934 = vmatpush1.bf16.msra.mxu0 %v859
    %935 = vmatprep.subr.bf16.mxu0 %v858
    %936 = vmatpush1.bf16.msra.mxu0 %v857
    %937 = vmatprep.subr.bf16.mxu0 %v888
    %938 = vmatpush2.bf16.msra.mxu0 %v887
    %939 = vmatprep.subr.bf16.mxu0 %v886
    %940 = vmatpush2.bf16.msra.mxu0 %v885
    %941 = vmatprep.subr.bf16.mxu0 %v884
    %942 = vmatpush2.bf16.msra.mxu0 %v883
    %943 = vmatprep.subr.bf16.mxu0 %v882
    %944 = vmatpush2.bf16.msra.mxu0 %v881
    %945 = vmatprep.subr.bf16.mxu0 %v880
    %946 = vmatpush2.bf16.msra.mxu0 %v879
    %947 = vmatprep.subr.bf16.mxu0 %v878
    %948 = vmatpush2.bf16.msra.mxu0 %v877
    %949 = vmatprep.subr.bf16.mxu0 %v876
    %950 = vmatpush2.bf16.msra.mxu0 %v875
    %951 = vmatprep.subr.bf16.mxu0 %v874
    %952 = vmatpush2.bf16.msra.mxu0 %v873
    %953 = vmatprep.mubr.bf16.mxu0 %v716
    %954 = vmatmul.mubr.bf16.gmra.mxu0 %v715
    %v955 = vpop.f32.mrf.mxu0
    %v956 = vadd.f32 %v754, %v955
    %v957 = vpop.f32.mrf.mxu0
    %v958 = vadd.f32 %v758, %v957
    %v959 = vpop.f32.mrf.mxu0
    %v960 = vpop.f32.mrf.mxu0
    %961 = vdwg.mxu0
    %vm962 = vcmp.gt.f32.partialorder %v956, 0.0
    %vm963 = vcmp.gt.f32.partialorder %v958, 0.0
    %v964 = vmul.f32 %v956, 0.01
    %v965 = vmul.f32 %v958, 0.01
    %v966 = vsel %vm962, %v956, %v964
    %v967 = vsel %vm963, %v958, %v965
    %v968 = vpack.c.bf16 %v966, %v966
    %v969 = vpack.c.bf16 %v967, %v967
    %v970 = vld [vmem:[#allocation11] sm:$0xf]
    %v971 = vld [vmem:[#allocation11 + $0x4] sm:$0xf]
    %v972 = vld [vmem:[#allocation11 + $0x8] sm:$0xf]
    %v973 = vld [vmem:[#allocation11 + $0xc] sm:$0xf]
    %v974 = vld [vmem:[#allocation11 + $0x10] sm:$0xf]
    %v975 = vld [vmem:[#allocation11 + $0x14] sm:$0xf]
    %v976 = vld [vmem:[#allocation11 + $0x18] sm:$0xf]
    %v977 = vld [vmem:[#allocation11 + $0x1c] sm:$0xf]
    %v978 = vld [vmem:[#allocation11 + $0x20] sm:$0xf]
    %v979 = vld [vmem:[#allocation11 + $0x24] sm:$0xf]
    %v980 = vld [vmem:[#allocation11 + $0x28] sm:$0xf]
    %v981 = vld [vmem:[#allocation11 + $0x2c] sm:$0xf]
    %v982 = vld [vmem:[#allocation11 + $0x30] sm:$0xf]
    %v983 = vld [vmem:[#allocation11 + $0x34] sm:$0xf]
    %v984 = vld [vmem:[#allocation11 + $0x38] sm:$0xf]
    %v985 = vld [vmem:[#allocation11 + $0x3c] sm:$0xf]
    %v986 = vld [vmem:[#allocation11 + $0x40] sm:$0xf]
    %v987 = vld [vmem:[#allocation11 + $0x44] sm:$0xf]
    %v988 = vld [vmem:[#allocation11 + $0x48] sm:$0xf]
    %v989 = vld [vmem:[#allocation11 + $0x4c] sm:$0xf]
    %v990 = vld [vmem:[#allocation11 + $0x50] sm:$0xf]
    %v991 = vld [vmem:[#allocation11 + $0x54] sm:$0xf]
    %v992 = vld [vmem:[#allocation11 + $0x58] sm:$0xf]
    %v993 = vld [vmem:[#allocation11 + $0x5c] sm:$0xf]
    %v994 = vld [vmem:[#allocation11 + $0x60] sm:$0xf]
    %v995 = vld [vmem:[#allocation11 + $0x64] sm:$0xf]
    %v996 = vld [vmem:[#allocation11 + $0x68] sm:$0xf]
    %v997 = vld [vmem:[#allocation11 + $0x6c] sm:$0xf]
    %v998 = vld [vmem:[#allocation11 + $0x70] sm:$0xf]
    %v999 = vld [vmem:[#allocation11 + $0x74] sm:$0xf]
    %v1000 = vld [vmem:[#allocation11 + $0x78] sm:$0xf]
    %v1001 = vld [vmem:[#allocation11 + $0x7c] sm:$0xf]
    %v1002 = vld [vmem:[%s10] sm:$0x1]
    %v1004 = vlaneseq
    %v1005 = vshrl.u32 %v1004, 7
    %v1006 = vsub.s32 0, %v1005
    %v1007 = vrot.slane %v1002, %v1006
    %v1041 = vunpack.c.l.b16 %v970
    %v1042 = vunpack.c.l.b16 %v971
    %v1043 = vunpack.c.l.b16 %v972
    %v1044 = vunpack.c.l.b16 %v973
    %v1045 = vunpack.c.l.b16 %v974
    %v1046 = vunpack.c.l.b16 %v975
    %v1047 = vunpack.c.l.b16 %v976
    %v1048 = vunpack.c.l.b16 %v977
    %v1049 = vunpack.c.l.b16 %v978
    %v1050 = vunpack.c.l.b16 %v979
    %v1051 = vunpack.c.l.b16 %v980
    %v1052 = vunpack.c.l.b16 %v981
    %v1053 = vunpack.c.l.b16 %v982
    %v1054 = vunpack.c.l.b16 %v983
    %v1055 = vunpack.c.l.b16 %v984
    %v1056 = vunpack.c.l.b16 %v985
    %v1057 = vunpack.c.l.b16 %v986
    %v1058 = vunpack.c.l.b16 %v987
    %v1059 = vunpack.c.l.b16 %v988
    %v1060 = vunpack.c.l.b16 %v989
    %v1061 = vunpack.c.l.b16 %v990
    %v1062 = vunpack.c.l.b16 %v991
    %v1063 = vunpack.c.l.b16 %v992
    %v1064 = vunpack.c.l.b16 %v993
    %v1065 = vunpack.c.l.b16 %v994
    %v1066 = vunpack.c.l.b16 %v995
    %v1067 = vunpack.c.l.b16 %v996
    %v1068 = vunpack.c.l.b16 %v997
    %v1069 = vunpack.c.l.b16 %v998
    %v1070 = vunpack.c.l.b16 %v999
    %v1071 = vunpack.c.l.b16 %v1000
    %v1072 = vunpack.c.l.b16 %v1001
    %v1073 = vpack.c.b16 %v1042, %v1041
    %v1074 = vpack.c.b16 %v1044, %v1043
    %v1075 = vpack.c.b16 %v1046, %v1045
    %v1076 = vpack.c.b16 %v1048, %v1047
    %v1077 = vpack.c.b16 %v1050, %v1049
    %v1078 = vpack.c.b16 %v1052, %v1051
    %v1079 = vpack.c.b16 %v1054, %v1053
    %v1080 = vpack.c.b16 %v1056, %v1055
    %v1081 = vpack.c.b16 %v1058, %v1057
    %v1082 = vpack.c.b16 %v1060, %v1059
    %v1083 = vpack.c.b16 %v1062, %v1061
    %v1084 = vpack.c.b16 %v1064, %v1063
    %v1085 = vpack.c.b16 %v1066, %v1065
    %v1086 = vpack.c.b16 %v1068, %v1067
    %v1087 = vpack.c.b16 %v1070, %v1069
    %v1088 = vpack.c.b16 %v1072, %v1071
    %1105 = vmatprep.subr.bf16.mxu0 0
    %1106 = vmatpush1.bf16.msra.mxu0 %v1080
    %1107 = vmatprep.subr.bf16.mxu0 0
    %1108 = vmatpush1.bf16.msra.mxu0 %v1079
    %1109 = vmatprep.subr.bf16.mxu0 0
    %1110 = vmatpush1.bf16.msra.mxu0 %v1078
    %1111 = vmatprep.subr.bf16.mxu0 0
    %1112 = vmatpush1.bf16.msra.mxu0 %v1077
    %1113 = vmatprep.subr.bf16.mxu0 0
    %1114 = vmatpush1.bf16.msra.mxu0 %v1076
    %1115 = vmatprep.subr.bf16.mxu0 0
    %1116 = vmatpush1.bf16.msra.mxu0 %v1075
    %1117 = vmatprep.subr.bf16.mxu0 0
    %1118 = vmatpush1.bf16.msra.mxu0 %v1074
    %1119 = vmatprep.subr.bf16.mxu0 0
    %1120 = vmatpush1.bf16.msra.mxu0 %v1073
    %1121 = vmatprep.subr.bf16.mxu0 0
    %1122 = vmatpush2.bf16.msra.mxu0 %v1088
    %1123 = vmatprep.subr.bf16.mxu0 0
    %1124 = vmatpush2.bf16.msra.mxu0 %v1087
    %1125 = vmatprep.subr.bf16.mxu0 0
    %1126 = vmatpush2.bf16.msra.mxu0 %v1086
    %1127 = vmatprep.subr.bf16.mxu0 0
    %1128 = vmatpush2.bf16.msra.mxu0 %v1085
    %1129 = vmatprep.subr.bf16.mxu0 0
    %1130 = vmatpush2.bf16.msra.mxu0 %v1084
    %1131 = vmatprep.subr.bf16.mxu0 0
    %1132 = vmatpush2.bf16.msra.mxu0 %v1083
    %1133 = vmatprep.subr.bf16.mxu0 0
    %1134 = vmatpush2.bf16.msra.mxu0 %v1082
    %1135 = vmatprep.subr.bf16.mxu0 0
    %1136 = vmatpush2.bf16.msra.mxu0 %v1081
    %1137 = vmatprep.mubr.bf16.mxu0 %v969
    %1138 = vmatmul.mubr.bf16.gmra.mxu0 %v968
    %v1139 = vpop.f32.mrf.mxu0
    %v1140 = vadd.f32 %v1007, %v1139
    %v1141 = vpop.f32.mrf.mxu0
    %v1142 = vpop.f32.mrf.mxu0
    %v1143 = vpop.f32.mrf.mxu0
    %1144 = vdwg.mxu0
    %1145 = vst [vmem:[#allocation13] sm:$0xff] %v1140
    // Predicated region
    $region70: #{tpu_custom_call.1} parent=1 // pred_check
      _
    $region71: #{tpu_custom_call.1} parent=1 // pred_check_branch
      %1147 = sbr.rel (0) target = $region73
    $region72: #{tpu_custom_call.1} parent=1 // pred_region
      %s1149 = ssub.s32 128, 128
      %1150 = vsyncadd [#allocation4], %s1149
      %s1152 = sshll.u32 [#allocation13], 4
      %s1153 = int_to_ptr.vmem [resolvable:$true] %s1152
      %1155 = dma.vmem_to_hbm [thread:$0]  %s1153, 128, %s11, [#allocation4]
    $region73: #{tpu_custom_call.1} parent=1 // pred_fallthru
      _
    // Predicated region
    $region74: #{tpu_custom_call.1} parent=1 // pred_check
      _
    $region75: #{tpu_custom_call.1} parent=1 // pred_check_branch
      %1157 = sbr.rel (0) target = $region77
    $region76: #{tpu_custom_call.1} parent=1 // pred_region
      %1158 = dma.done [#allocation4], 128
    $region77: #{tpu_custom_call.1} parent=1 // pred_fallthru
      _
    %1159 = vsyncpa [#allocation3], 1
    %1160 = vsyncpa [#allocation6], 1
    %1161 = vsyncpa [#allocation9], 1
    %1162 = vsyncpa [#allocation12], 1
    %1163 = vsyncpa [#allocation4], 1

</llo_original>
